<compile_context>
chip_gen: v5e
topology: v5e:2x2
jax: 0.10.0
libtpu: 0.0.40
codegen_flags: <defaults>
</compile_context>

<pallas_src>
import jax
import jax.numpy as jnp
from jax.experimental import pallas as pl
from jax.experimental.pallas import tpu as pltpu


_TILE_BYTES_MAX = 2 * 1024 * 1024   # per-tile cap: 1024x512 f32 / 1024x1024 bf16
_TILE_TARGET = 1024                 # preferred tile edge when an axis must be tiled
_TINY_BYTES = 64 * 1024             # below this per-(C,T)-plane size, skip the kernel
_MIN_GRID_STEPS = 4                 # >= 2x TensorCores (v7x megacore) when possible
_VMEM_LIMIT = 32 * 1024 * 1024      # == v6e/v7x scoped default; raises v5e's 16 MiB


def _transpose_tile_kernel(x_ref, o_ref):
    # Batch dim is squeezed by the BlockSpec, so this is a clean 2-D tile
    # transpose (TC, TT) -> (TT, TC).  Lowers to XLU vxpose (vector-extended
    # slot), which overlaps with the HBM DMAs on this mem-bound path.
    # TODO(synk): on v7x, check bundles for vxpose saturation before growing tiles.
    o_ref[...] = x_ref[...].T


def _cdiv(a: int, b: int) -> int:
    return -(-a // b)


def _pick_tile(dim: int, cap: int) -> int:
    """Full extent if it fits under `cap`; otherwise the 128-multiple tile
    <= cap that minimizes masked-remainder waste (divisor-aware)."""
    cap = max(128, (cap // 128) * 128)
    if dim <= cap:
        return dim
    best, best_waste = cap, None
    for cand in range(cap, 127, -128):
        waste = _cdiv(dim, cand) * cand - dim
        if waste == 0:
            return cand
        if best_waste is None or waste < best_waste:
            best, best_waste = cand, waste
    return best


def _choose_tiles(b: int, c: int, t: int, itemsize: int):
    budget_elems = _TILE_BYTES_MAX // itemsize

    # C side (output lane axis): full extent whenever it still leaves room for
    # a >=128-wide T tile -> output write-back is one contiguous HBM burst.
    if c * 128 <= budget_elems:
        tc = c
    else:
        tc = _pick_tile(c, min(_TILE_TARGET, budget_elems // 128))

    # T side: full extent if the whole (tc, T) slab fits the byte budget,
    # else a divisor-aware 128-multiple tile within the remaining budget.
    tt = _pick_tile(t, budget_elems // tc)

    # v7x has 2 TensorCores: make sure the grid has enough steps to shard
    # across them (and to give the pipeline some depth) when b is small.
    # Split T first so tc == C (contiguous write-back) is preserved.
    while b * _cdiv(c, tc) * _cdiv(t, tt) < _MIN_GRID_STEPS and tt > 128:
        new_tt = _pick_tile(t, max(128, tt // 2))
        if new_tt >= tt:
            break
        tt = new_tt
    return tc, tt


def _transpose_last_pallas(x3):
    b, c, t = x3.shape
    itemsize = jnp.dtype(x3.dtype).itemsize
    tc, tt = _choose_tiles(b, c, t, itemsize)

    # Innermost grid axis = C blocks so consecutive output tiles are adjacent
    # along the output's last (C) axis in HBM.
    grid = (b, _cdiv(t, tt), _cdiv(c, tc))

    # Pure memory traffic: tell the XLA scheduler there is no compute here.
    cost = pl.CostEstimate(
        flops=0,
        transcendentals=0,
        bytes_accessed=2 * b * c * t * itemsize,
    )

    return pl.pallas_call(
        _transpose_tile_kernel,
        out_shape=jax.ShapeDtypeStruct((b, t, c), x3.dtype),
        grid_spec=pltpu.PrefetchScalarGridSpec(
            num_scalar_prefetch=0,
            grid=grid,
            in_specs=[
                # Leading batch dim squeezed (None) -> kernel sees (TC, TT).
                pl.BlockSpec((None, tc, tt), lambda bi, ti, ci: (bi, ci, ti)),
            ],
            out_specs=pl.BlockSpec((None, tt, tc), lambda bi, ti, ci: (bi, ti, ci)),
        ),
        compiler_params=pltpu.CompilerParams(
            # Every grid point writes a distinct output tile -> all axes are
            # independent and can shard across TensorCores.
            dimension_semantics=("parallel", "parallel", "parallel"),
            # Never below any chip's scoped default (v6e/v7x: 32 MiB); raises
            # v5e's 16 MiB default.  Live buffers (<= ~8 MiB) fit with room.
            vmem_limit_bytes=_VMEM_LIMIT,
        ),
        cost_estimate=cost,
    )(x3)


def transpose_last(x, deconstruct_idx=None):
    """Pallas equivalent of fairseq's TransposeLast.forward."""
    if deconstruct_idx is not None:
        x = x[deconstruct_idx]

    x = jnp.asarray(x)
    if x.ndim < 2:
        raise ValueError("TransposeLast requires at least 2 dims")

    *lead, c, t = x.shape
    b = 1
    for d in lead:
        b *= d
    itemsize = jnp.dtype(x.dtype).itemsize

    # Fallback: degenerate batch, tiny planes, or a trailing dim < 128 (lane
    # width) where the kernel's stores would lower to masked vst.msk partial
    # stores -- XLA's transpose handles those at least as well without the
    # kernel-launch overhead.
    if b == 0 or c < 128 or t < 128 or c * t * itemsize <= _TINY_BYTES:
        return jnp.swapaxes(x, -2, -1)

    x3 = x.reshape(b, c, t)
    out3 = _transpose_last_pallas(x3)
    return out3.reshape(*lead, t, c)


if __name__ == "__main__":
    key = jax.random.PRNGKey(0)
    k1, k2, k3, k4 = jax.random.split(key, 4)

    # (1) Pallas path, 128-aligned dims: (2, 256, 1024) f32
    #     -> tc=256 (full C), T split so the grid shards across cores.
    x1 = jax.random.normal(k1, (2, 256, 1024), dtype=jnp.float32)
    y1 = jax.block_until_ready(transpose_last(x1))
    assert y1.shape == (2, 1024, 256)
    assert jnp.array_equal(y1, jnp.swapaxes(x1, -2, -1)), "mismatch (even tiles)"

    # (2) Pallas path, non-128-multiple full-extent C: (2, 200, 640) f32.
    x2 = jax.random.normal(k2, (2, 200, 640), dtype=jnp.float32)
    y2 = jax.block_until_ready(transpose_last(x2))
    assert y2.shape == (2, 640, 200)
    assert jnp.array_equal(y2, jnp.swapaxes(x2, -2, -1)), "mismatch (odd full-extent)"

    # (3) Pallas path, masked remainder blocks along T: (1, 600, 2000) f32
    #     -> tc=600 (full C), tt=512 with a partially-masked edge block.
    x3 = jax.random.normal(k3, (1, 600, 2000), dtype=jnp.float32)
    y3 = jax.block_until_ready(transpose_last(x3))
    assert y3.shape == (1, 2000, 600)
    assert jnp.array_equal(y3, jnp.swapaxes(x3, -2, -1)), "mismatch (ragged T)"

    # (4) bf16 with extra leading dims: (2, 2, 256, 768).
    x4 = jax.random.normal(k4, (2, 2, 256, 768), dtype=jnp.bfloat16)
    y4 = jax.block_until_ready(transpose_last(x4))
    assert y4.shape == (2, 2, 768, 256)
    assert jnp.array_equal(y4, jnp.swapaxes(x4, -2, -1)), "mismatch (bf16 4-D)"

    # (5) Narrow C (< 128 lanes) and tiny shapes -> wrapper fallback path.
    x5 = jax.random.normal(k1, (2, 64, 512), dtype=jnp.float32)
    y5 = jax.block_until_ready(transpose_last(x5))
    assert jnp.array_equal(y5, jnp.swapaxes(x5, -2, -1)), "mismatch (narrow C)"
    x6 = jax.random.normal(k2, (2, 8, 16), dtype=jnp.float32)
    y6 = jax.block_until_ready(transpose_last(x6))
    assert jnp.array_equal(y6, jnp.swapaxes(x6, -2, -1)), "mismatch (tiny)"

    # (6) deconstruct_idx path: module indexes a tuple-like input first.
    y7 = jax.block_until_ready(transpose_last((x6, x6 * 2.0), deconstruct_idx=1))
    assert jnp.array_equal(y7, jnp.swapaxes(x6 * 2.0, -2, -1)), "mismatch (idx)"

    print("KERNEL_OK")
</pallas_src>

<mosaic_0001>
module attributes {stable_mosaic.version = 11 : i64} {
  func.func @_transpose_tile_kernel(%arg0: i32, %arg1: i32, %arg2: i32, %arg3: memref<1x256x512xf32, #tpu.memory_space<vmem>>, %arg4: memref<1x512x256xf32, #tpu.memory_space<vmem>>) attributes {dimension_semantics = [#tpu.dimension_semantics<parallel>, #tpu.dimension_semantics<parallel>, #tpu.dimension_semantics<parallel>], iteration_bounds = array<i64: 2, 2, 1>, scalar_prefetch = 0 : i64, scratch_operands = 0 : i64, tpu.core_type = #tpu.core_type<tc>, window_params = [{transform_indices = @transform_0, window_bounds = array<i64: 1, 256, 512>}, {transform_indices = @transform_1, window_bounds = array<i64: 1, 512, 256>}]} {
    %c0 = arith.constant 0 : index
    %c0_0 = arith.constant 0 : index
    %c0_1 = arith.constant 0 : index
    %0 = vector.load %arg3[%c0, %c0_0, %c0_1] : memref<1x256x512xf32, #tpu.memory_space<vmem>>, vector<1x256x512xf32>
    %1 = vector.shape_cast %0 : vector<1x256x512xf32> to vector<256x512xf32>
    %2 = tpu.transpose %1, [1, 0] : vector<256x512xf32> -> vector<512x256xf32>
    %c0_2 = arith.constant 0 : index
    %c0_3 = arith.constant 0 : index
    %c0_4 = arith.constant 0 : index
    %3 = vector.load %arg4[%c0_2, %c0_3, %c0_4] : memref<1x512x256xf32, #tpu.memory_space<vmem>>, vector<1x512x256xf32>
    %4 = vector.shape_cast %3 : vector<1x512x256xf32> to vector<512x256xf32>
    %5 = vector.shape_cast %2 : vector<512x256xf32> to vector<1x512x256xf32>
    tpu.vector_store %arg4[%c0_2, %c0_3, %c0_4], %5 {strides = array<i32>} : memref<1x512x256xf32, #tpu.memory_space<vmem>>, vector<1x512x256xf32>,
    return
  }
  func.func @transform_0(%arg0: i32, %arg1: i32, %arg2: i32) -> (i32, i32, i32) {
    %c0_i32 = arith.constant 0 : i32
    return %arg0, %arg2, %arg1 : i32, i32, i32
  }
  func.func @transform_1(%arg0: i32, %arg1: i32, %arg2: i32) -> (i32, i32, i32) {
    %c0_i32 = arith.constant 0 : i32
    return %arg0, %arg1, %arg2 : i32, i32, i32
  }
}

</mosaic_0001>

<llo_original>
// kernel: tpu_custom_call.1
$region0: #{tpu_custom_call.1}
  #allocation0 [shape = 'u32[]', space=smem, size = 0x4, offset = 0x4, fixed_abs, tag = 'smem constant byte address 0x4 - core index']
  #allocation1 [shape = 'u32[72,128]{1,0:T(1,128)}', space=vmem, size = 0x9000, scoped, tag = 'internal scratch']
  %s0 = inlined_call_operand.hbm [shape: f32[2,256,1024], index: 0, kind: input, shape index: {}]
  %s1 = inlined_call_operand.hbm [shape: f32[2,1024,256], index: 1, kind: output, shape index: {}]
  %s2 = sld [smem:[#allocation0]]
  $region41: #{tpu_custom_call.1} parent=0
    _
  %s4 = ssub.s32 1, %s2
  %s5 = scalar_select 0, %s4, %s2
  $region1: #{tpu_custom_call.1} parent=0
    #allocation2 [shape = 'u8[1048576]{0}', space=vmem, size = 0x100000, scoped, tag = 'input window, operand 0']
    #allocation3 [shape = 's32[2]{0}', space=sflag, size = 0x8, scoped, tag = 'scoped memory for tpu_custom_call.1']
    #allocation4 [shape = 's32[2]{0}', space=sflag, size = 0x8, scoped, tag = 'scoped memory for tpu_custom_call.1']
    #allocation5 [shape = 'u8[1048576]{0}', space=vmem, size = 0x100000, scoped, tag = 'output window, operand 0']
    %6 = vsyncpa [#allocation3], 0
    %s7 = scalar_lea.sflag [#allocation3], 1
    %8 = vsyncpa %s7, 0
    %9 = vsyncpa [#allocation4], 0
    %s10 = scalar_lea.sflag [#allocation4], 1
    %11 = vsyncpa %s10, 0
    loop: start=0, step=1, limit=6
    $region2: #{tpu_custom_call.1} parent=1 // loop_pre_header
      _
    $region3: #{tpu_custom_call.1} parent=1 // loop_header
      %s13 = sphi 0, %s17
      %p14 = scmp.ge.s32.totalorder %s13, 6
      %s20 = sphi 0, %s39
      %s21 = sphi 0, %s35
      %s22 = sphi 0, %s31
      %s23 = sphi 0, %s20
      %s24 = sphi 0, %s21
      %s25 = sphi 0, %s22
      %s26 = sphi 0, %s23
      %s27 = sphi 0, %s24
      %s28 = sphi 0, %s25
      %s46 = sphi 0, %s48
      %s49 = sphi 0, %s46
      %s50 = sphi 0, %s49
      %s66 = sphi 0, %s50
      %s76 = sphi 0, %s78
      %s79 = sphi 0, %s76
      %s80 = sphi 0, %s79
      %s96 = sphi 0, %s80
    $region4: #{tpu_custom_call.1} parent=1 // loop_header_branch
      %16 = sbr.rel (%p14) target = $region8
    $region5: #{tpu_custom_call.1} parent=1 // loop_body
      %s18 = ssub.s32 %s13, 1
      %s19 = ssub.s32 %s13, 2
      %s29 = sadd.s32 1, %s22
      %p30 = scmp.ge.s32.totalorder %s29, 1
      %s31 = scalar_select %p30, 0, %s29
      %s32 = sadd.s32 1, %s21
      %s33 = scalar_select %p30, %s32, %s21
      %p34 = scmp.ge.s32.totalorder %s33, 2
      %s35 = scalar_select %p34, 0, %s33
      %s36 = sadd.s32 1, %s20
      %s37 = scalar_select %p34, %s36, %s20
      %p38 = scmp.ge.s32.totalorder %s37, 2
      %s39 = scalar_select %p38, 0, %s37
      %s40 = ssub.s32 %s20, %s39
      %s41 = ssub.s32 %s22, %s31
      %s42 = sor.u32 %s40, %s41
      %s43 = ssub.s32 %s21, %s35
      %s44 = sor.u32 %s42, %s43
      %p45 = scmp.eq.s32.totalorder %s44, 0
      %s47 = sadd.s32 %s46, 1
      %s48 = scalar_select %p45, %s46, %s47
      %p51 = pneg %p45
      %p52 = scmp.eq.s32.totalorder %s13, 3
      %p53 = por %p51, %p52
      %p54 = scmp.ne.s32.totalorder %s46, %s49
      %p55 = scmp.eq.s32.totalorder %s13, 0
      %p56 = por %p54, %p55
      %p57 = scmp.ne.s32.totalorder %s46, %s49
      %p58 = scmp.eq.s32.totalorder %s18, 3
      %p59 = por %p57, %p58
      %p60 = scmp.ne.s32.totalorder %s49, %s50
      %p61 = scmp.eq.s32.totalorder %s18, 0
      %p62 = por %p60, %p61
      %p63 = scmp.ne.s32.totalorder %s49, %s50
      %p64 = scmp.eq.s32.totalorder %s19, 3
      %p65 = por %p63, %p64
      %p67 = scmp.ne.s32.totalorder %s50, %s66
      %p68 = scmp.eq.s32.totalorder %s19, 0
      %p69 = por %p67, %p68
      %s70 = ssub.s32 %s20, %s39
      %s71 = ssub.s32 %s21, %s35
      %s72 = sor.u32 %s70, %s71
      %s73 = ssub.s32 %s22, %s31
      %s74 = sor.u32 %s72, %s73
      %p75 = scmp.eq.s32.totalorder %s74, 0
      %s77 = sadd.s32 %s76, 1
      %s78 = scalar_select %p75, %s76, %s77
      %p81 = pneg %p75
      %p82 = scmp.eq.s32.totalorder %s13, 3
      %p83 = por %p81, %p82
      %p84 = scmp.ne.s32.totalorder %s76, %s79
      %p85 = scmp.eq.s32.totalorder %s13, 0
      %p86 = por %p84, %p85
      %p87 = scmp.ne.s32.totalorder %s76, %s79
      %p88 = scmp.eq.s32.totalorder %s18, 3
      %p89 = por %p87, %p88
      %p90 = scmp.ne.s32.totalorder %s79, %s80
      %p91 = scmp.eq.s32.totalorder %s18, 0
      %p92 = por %p90, %p91
      %p93 = scmp.ne.s32.totalorder %s79, %s80
      %p94 = scmp.eq.s32.totalorder %s19, 3
      %p95 = por %p93, %p94
      %p97 = scmp.ne.s32.totalorder %s80, %s96
      %p98 = scmp.eq.s32.totalorder %s19, 0
      %p99 = por %p97, %p98
      %p100 = scmp.le.s32.totalorder 1, %s13
      %p101 = scmp.lt.s32.totalorder %s13, 5
      %p102 = pnand %p100, %p101
      %p103 = pneg %p102
      // Predicated region
      $region9: #{tpu_custom_call.1} parent=5 // pred_check
        _
      $region10: #{tpu_custom_call.1} parent=5 // pred_check_branch
        %105 = sbr.rel (%p102) target = $region12
      $region11: #{tpu_custom_call.1} parent=5 // pred_region
        %s106 = ssub.s32 %s13, 1
      $region12: #{tpu_custom_call.1} parent=5 // pred_fallthru
        _
      %p107 = scmp.lt.s32.totalorder %s13, 4
      // Predicated region
      $region13: #{tpu_custom_call.1} parent=5 // pred_check
        %p108 = pneg %p107
      $region14: #{tpu_custom_call.1} parent=5 // pred_check_branch
        %110 = sbr.rel (%p108) target = $region16
      $region15: #{tpu_custom_call.1} parent=5 // pred_region
        // Predicated region
        $region17: #{tpu_custom_call.1} parent=15 // pred_check
          %p111 = pneg %p56
        $region18: #{tpu_custom_call.1} parent=15 // pred_check_branch
          %113 = sbr.rel (%p111) target = $region20
        $region19: #{tpu_custom_call.1} parent=15 // pred_region
          %s114 = sand.u32 %s46, 1
          %s115 = scalar_lea.sflag [#allocation3], %s114
          %s116 = sand.u32 %s46, 1
          %s117 = smul.addr %s116, 1024
          %s118 = scalar_lea.vmem [#allocation2], %s117
          %s119 = smul.u32 32, %s22
          %s120 = smul.u32 4, %s21
          %122 = vsyncadd %s115, 0
          %s123 = smul.addr %s119, 8
          %s124 = sadd.s32 %s120, %s123
          %s125 = smul.addr %s20, 256
          %s126 = sadd.s32 %s124, %s125
          %s127 = smul.addr %s126, 8
          %s128 = scalar_lea.hbm %s0, %s127
          %s129 = sshll.u32 %s128, 4
          %s130 = int_to_ptr.hbm [resolvable:$true] %s129
          %s131 = sshll.u32 %s118, 4
          %s132 = int_to_ptr.vmem [resolvable:$true] %s131
          %137 = dma.hbm_to_vmem [thread:$0]  %s130, 16384, %s132, %s115, 1024, 512, 32
        $region20: #{tpu_custom_call.1} parent=15 // pred_fallthru
          _
      $region16: #{tpu_custom_call.1} parent=5 // pred_fallthru
        _
      %p138 = scmp.le.s32.totalorder 1, %s13
      %p139 = scmp.lt.s32.totalorder %s13, 5
      %p140 = pnand %p138, %p139
      %p141 = pneg %p140
      // Predicated region
      $region21: #{tpu_custom_call.1} parent=5 // pred_check
        _
      $region22: #{tpu_custom_call.1} parent=5 // pred_check_branch
        %143 = sbr.rel (%p140) target = $region24
      $region23: #{tpu_custom_call.1} parent=5 // pred_region
        %s144 = ssub.s32 %s13, 1
        %s145 = sand.u32 %s49, 1
        %s146 = scalar_lea.sflag [#allocation3], %s145
        %s147 = sand.u32 %s49, 1
        %s148 = smul.addr %s147, 1024
        %s149 = scalar_lea.vmem [#allocation2], %s148
        // Predicated region
        $region25: #{tpu_custom_call.1} parent=23 // pred_check
          %p150 = pneg %p62
        $region26: #{tpu_custom_call.1} parent=23 // pred_check_branch
          %152 = sbr.rel (%p150) target = $region28
        $region27: #{tpu_custom_call.1} parent=23 // pred_region
          %154 = dma.done %s146, 16384
        $region28: #{tpu_custom_call.1} parent=23 // pred_fallthru
          _
        %s155 = sand.u32 %s49, 1
        %s156 = scalar_lea.sflag [#allocation3], %s155
        %s157 = sand.u32 %s49, 1
        %s158 = smul.addr %s157, 1024
        %s159 = scalar_lea.vmem [#allocation2], %s158
        %p160 = pneg %p62
        %p161 = pneg %p59
        %p162 = pneg %p92
        %p163 = pneg %p89
        %s164 = sand.u32 %s79, 1
        %s165 = scalar_lea.sflag [#allocation4], %s164
        %s166 = sand.u32 %s79, 1
        %s167 = smul.addr %s166, 1024
        %s168 = scalar_lea.vmem [#allocation5], %s167
        %s169 = smul.u32 32, %s25
        %s170 = smul.u32 4, %s24
        %s171 = smul.u32 64, %s24
        %s172 = smul.u32 2, %s25
        %v173 = vld [vmem:[%s149] sm:$0xff]
        %v174 = vld [vmem:[%s149 + $0x8] sm:$0xff]
        %v175 = vld [vmem:[%s149 + $0x10] sm:$0xff]
        %v176 = vld [vmem:[%s149 + $0x18] sm:$0xff]
        %v177 = vld [vmem:[%s149 + $0x20] sm:$0xff]
        %v178 = vld [vmem:[%s149 + $0x28] sm:$0xff]
        %v179 = vld [vmem:[%s149 + $0x30] sm:$0xff]
        %v180 = vld [vmem:[%s149 + $0x38] sm:$0xff]
        %v181 = vld [vmem:[%s149 + $0x40] sm:$0xff]
        %v182 = vld [vmem:[%s149 + $0x48] sm:$0xff]
        %v183 = vld [vmem:[%s149 + $0x50] sm:$0xff]
        %v184 = vld [vmem:[%s149 + $0x58] sm:$0xff]
        %v185 = vld [vmem:[%s149 + $0x60] sm:$0xff]
        %v186 = vld [vmem:[%s149 + $0x68] sm:$0xff]
        %v187 = vld [vmem:[%s149 + $0x70] sm:$0xff]
        %v188 = vld [vmem:[%s149 + $0x78] sm:$0xff]
        %v189 = vld [vmem:[%s149 + $0x80] sm:$0xff]
        %v190 = vld [vmem:[%s149 + $0x88] sm:$0xff]
        %v191 = vld [vmem:[%s149 + $0x90] sm:$0xff]
        %v192 = vld [vmem:[%s149 + $0x98] sm:$0xff]
        %v193 = vld [vmem:[%s149 + $0xa0] sm:$0xff]
        %v194 = vld [vmem:[%s149 + $0xa8] sm:$0xff]
        %v195 = vld [vmem:[%s149 + $0xb0] sm:$0xff]
        %v196 = vld [vmem:[%s149 + $0xb8] sm:$0xff]
        %v197 = vld [vmem:[%s149 + $0xc0] sm:$0xff]
        %v198 = vld [vmem:[%s149 + $0xc8] sm:$0xff]
        %v199 = vld [vmem:[%s149 + $0xd0] sm:$0xff]
        %v200 = vld [vmem:[%s149 + $0xd8] sm:$0xff]
        %v201 = vld [vmem:[%s149 + $0xe0] sm:$0xff]
        %v202 = vld [vmem:[%s149 + $0xe8] sm:$0xff]
        %v203 = vld [vmem:[%s149 + $0xf0] sm:$0xff]
        %v204 = vld [vmem:[%s149 + $0xf8] sm:$0xff]
        %v205 = vld [vmem:[%s149 + $0x100] sm:$0xff]
        %v206 = vld [vmem:[%s149 + $0x108] sm:$0xff]
        %v207 = vld [vmem:[%s149 + $0x110] sm:$0xff]
        %v208 = vld [vmem:[%s149 + $0x118] sm:$0xff]
        %v209 = vld [vmem:[%s149 + $0x120] sm:$0xff]
        %v210 = vld [vmem:[%s149 + $0x128] sm:$0xff]
        %v211 = vld [vmem:[%s149 + $0x130] sm:$0xff]
        %v212 = vld [vmem:[%s149 + $0x138] sm:$0xff]
        %v213 = vld [vmem:[%s149 + $0x140] sm:$0xff]
        %v214 = vld [vmem:[%s149 + $0x148] sm:$0xff]
        %v215 = vld [vmem:[%s149 + $0x150] sm:$0xff]
        %v216 = vld [vmem:[%s149 + $0x158] sm:$0xff]
        %v217 = vld [vmem:[%s149 + $0x160] sm:$0xff]
        %v218 = vld [vmem:[%s149 + $0x168] sm:$0xff]
        %v219 = vld [vmem:[%s149 + $0x170] sm:$0xff]
        %v220 = vld [vmem:[%s149 + $0x178] sm:$0xff]
        %v221 = vld [vmem:[%s149 + $0x180] sm:$0xff]
        %v222 = vld [vmem:[%s149 + $0x188] sm:$0xff]
        %v223 = vld [vmem:[%s149 + $0x190] sm:$0xff]
        %v224 = vld [vmem:[%s149 + $0x198] sm:$0xff]
        %v225 = vld [vmem:[%s149 + $0x1a0] sm:$0xff]
        %v226 = vld [vmem:[%s149 + $0x1a8] sm:$0xff]
        %v227 = vld [vmem:[%s149 + $0x1b0] sm:$0xff]
        %v228 = vld [vmem:[%s149 + $0x1b8] sm:$0xff]
        %v229 = vld [vmem:[%s149 + $0x1c0] sm:$0xff]
        %v230 = vld [vmem:[%s149 + $0x1c8] sm:$0xff]
        %v231 = vld [vmem:[%s149 + $0x1d0] sm:$0xff]
        %v232 = vld [vmem:[%s149 + $0x1d8] sm:$0xff]
        %v233 = vld [vmem:[%s149 + $0x1e0] sm:$0xff]
        %v234 = vld [vmem:[%s149 + $0x1e8] sm:$0xff]
        %v235 = vld [vmem:[%s149 + $0x1f0] sm:$0xff]
        %v236 = vld [vmem:[%s149 + $0x1f8] sm:$0xff]
        %v237 = vld [vmem:[%s149 + $0x200] sm:$0xff]
        %v238 = vld [vmem:[%s149 + $0x208] sm:$0xff]
        %v239 = vld [vmem:[%s149 + $0x210] sm:$0xff]
        %v240 = vld [vmem:[%s149 + $0x218] sm:$0xff]
        %v241 = vld [vmem:[%s149 + $0x220] sm:$0xff]
        %v242 = vld [vmem:[%s149 + $0x228] sm:$0xff]
        %v243 = vld [vmem:[%s149 + $0x230] sm:$0xff]
        %v244 = vld [vmem:[%s149 + $0x238] sm:$0xff]
        %v245 = vld [vmem:[%s149 + $0x240] sm:$0xff]
        %v246 = vld [vmem:[%s149 + $0x248] sm:$0xff]
        %v247 = vld [vmem:[%s149 + $0x250] sm:$0xff]
        %v248 = vld [vmem:[%s149 + $0x258] sm:$0xff]
        %v249 = vld [vmem:[%s149 + $0x260] sm:$0xff]
        %v250 = vld [vmem:[%s149 + $0x268] sm:$0xff]
        %v251 = vld [vmem:[%s149 + $0x270] sm:$0xff]
        %v252 = vld [vmem:[%s149 + $0x278] sm:$0xff]
        %v253 = vld [vmem:[%s149 + $0x280] sm:$0xff]
        %v254 = vld [vmem:[%s149 + $0x288] sm:$0xff]
        %v255 = vld [vmem:[%s149 + $0x290] sm:$0xff]
        %v256 = vld [vmem:[%s149 + $0x298] sm:$0xff]
        %v257 = vld [vmem:[%s149 + $0x2a0] sm:$0xff]
        %v258 = vld [vmem:[%s149 + $0x2a8] sm:$0xff]
        %v259 = vld [vmem:[%s149 + $0x2b0] sm:$0xff]
        %v260 = vld [vmem:[%s149 + $0x2b8] sm:$0xff]
        %v261 = vld [vmem:[%s149 + $0x2c0] sm:$0xff]
        %v262 = vld [vmem:[%s149 + $0x2c8] sm:$0xff]
        %v263 = vld [vmem:[%s149 + $0x2d0] sm:$0xff]
        %v264 = vld [vmem:[%s149 + $0x2d8] sm:$0xff]
        %v265 = vld [vmem:[%s149 + $0x2e0] sm:$0xff]
        %v266 = vld [vmem:[%s149 + $0x2e8] sm:$0xff]
        %v267 = vld [vmem:[%s149 + $0x2f0] sm:$0xff]
        %v268 = vld [vmem:[%s149 + $0x2f8] sm:$0xff]
        %v269 = vld [vmem:[%s149 + $0x300] sm:$0xff]
        %v270 = vld [vmem:[%s149 + $0x308] sm:$0xff]
        %v271 = vld [vmem:[%s149 + $0x310] sm:$0xff]
        %v272 = vld [vmem:[%s149 + $0x318] sm:$0xff]
        %v273 = vld [vmem:[%s149 + $0x320] sm:$0xff]
        %v274 = vld [vmem:[%s149 + $0x328] sm:$0xff]
        %v275 = vld [vmem:[%s149 + $0x330] sm:$0xff]
        %v276 = vld [vmem:[%s149 + $0x338] sm:$0xff]
        %v277 = vld [vmem:[%s149 + $0x340] sm:$0xff]
        %v278 = vld [vmem:[%s149 + $0x348] sm:$0xff]
        %v279 = vld [vmem:[%s149 + $0x350] sm:$0xff]
        %v280 = vld [vmem:[%s149 + $0x358] sm:$0xff]
        %v281 = vld [vmem:[%s149 + $0x360] sm:$0xff]
        %v282 = vld [vmem:[%s149 + $0x368] sm:$0xff]
        %v283 = vld [vmem:[%s149 + $0x370] sm:$0xff]
        %v284 = vld [vmem:[%s149 + $0x378] sm:$0xff]
        %v285 = vld [vmem:[%s149 + $0x380] sm:$0xff]
        %v286 = vld [vmem:[%s149 + $0x388] sm:$0xff]
        %v287 = vld [vmem:[%s149 + $0x390] sm:$0xff]
        %v288 = vld [vmem:[%s149 + $0x398] sm:$0xff]
        %v289 = vld [vmem:[%s149 + $0x3a0] sm:$0xff]
        %v290 = vld [vmem:[%s149 + $0x3a8] sm:$0xff]
        %v291 = vld [vmem:[%s149 + $0x3b0] sm:$0xff]
        %v292 = vld [vmem:[%s149 + $0x3b8] sm:$0xff]
        %v293 = vld [vmem:[%s149 + $0x3c0] sm:$0xff]
        %v294 = vld [vmem:[%s149 + $0x3c8] sm:$0xff]
        %v295 = vld [vmem:[%s149 + $0x3d0] sm:$0xff]
        %v296 = vld [vmem:[%s149 + $0x3d8] sm:$0xff]
        %v297 = vld [vmem:[%s149 + $0x3e0] sm:$0xff]
        %v298 = vld [vmem:[%s149 + $0x3e8] sm:$0xff]
        %v299 = vld [vmem:[%s149 + $0x3f0] sm:$0xff]
        %v300 = vld [vmem:[%s149 + $0x3f8] sm:$0xff]
        %301 = vxpose.xlu0.b32.start [1/16] %v173, 128
        %302 = vxpose.xlu0.b32.cont [2/16] %v177, 128
        %303 = vxpose.xlu0.b32.cont [3/16] %v181, 128
        %304 = vxpose.xlu0.b32.cont [4/16] %v185, 128
        %305 = vxpose.xlu0.b32.cont [5/16] %v189, 128
        %306 = vxpose.xlu0.b32.cont [6/16] %v193, 128
        %307 = vxpose.xlu0.b32.cont [7/16] %v197, 128
        %308 = vxpose.xlu0.b32.cont [8/16] %v201, 128
        %309 = vxpose.xlu0.b32.cont [9/16] %v205, 128
        %310 = vxpose.xlu0.b32.cont [10/16] %v209, 128
        %311 = vxpose.xlu0.b32.cont [11/16] %v213, 128
        %312 = vxpose.xlu0.b32.cont [12/16] %v217, 128
        %313 = vxpose.xlu0.b32.cont [13/16] %v221, 128
        %314 = vxpose.xlu0.b32.cont [14/16] %v225, 128
        %315 = vxpose.xlu0.b32.cont [15/16] %v229, 128
        %316 = vxpose.xlu0.b32.end [16/16] %v233, 128
        %v317 = vpop.trf.xlu0
        %v318 = vpop.trf.xlu0
        %v319 = vpop.trf.xlu0
        %v320 = vpop.trf.xlu0
        %v321 = vpop.trf.xlu0
        %v322 = vpop.trf.xlu0
        %v323 = vpop.trf.xlu0
        %v324 = vpop.trf.xlu0
        %v325 = vpop.trf.xlu0
        %v326 = vpop.trf.xlu0
        %v327 = vpop.trf.xlu0
        %v328 = vpop.trf.xlu0
        %v329 = vpop.trf.xlu0
        %v330 = vpop.trf.xlu0
        %v331 = vpop.trf.xlu0
        %v332 = vpop.trf.xlu0
        %333 = vxpose.xlu0.b32.start [1/16] %v174, 128
        %334 = vxpose.xlu0.b32.cont [2/16] %v178, 128
        %335 = vxpose.xlu0.b32.cont [3/16] %v182, 128
        %336 = vxpose.xlu0.b32.cont [4/16] %v186, 128
        %337 = vxpose.xlu0.b32.cont [5/16] %v190, 128
        %338 = vxpose.xlu0.b32.cont [6/16] %v194, 128
        %339 = vxpose.xlu0.b32.cont [7/16] %v198, 128
        %340 = vxpose.xlu0.b32.cont [8/16] %v202, 128
        %341 = vxpose.xlu0.b32.cont [9/16] %v206, 128
        %342 = vxpose.xlu0.b32.cont [10/16] %v210, 128
        %343 = vxpose.xlu0.b32.cont [11/16] %v214, 128
        %344 = vxpose.xlu0.b32.cont [12/16] %v218, 128
        %345 = vxpose.xlu0.b32.cont [13/16] %v222, 128
        %346 = vxpose.xlu0.b32.cont [14/16] %v226, 128
        %347 = vxpose.xlu0.b32.cont [15/16] %v230, 128
        %348 = vxpose.xlu0.b32.end [16/16] %v234, 128
        %v349 = vpop.trf.xlu0
        %v350 = vpop.trf.xlu0
        %v351 = vpop.trf.xlu0
        %v352 = vpop.trf.xlu0
        %v353 = vpop.trf.xlu0
        %v354 = vpop.trf.xlu0
        %v355 = vpop.trf.xlu0
        %v356 = vpop.trf.xlu0
        %v357 = vpop.trf.xlu0
        %v358 = vpop.trf.xlu0
        %v359 = vpop.trf.xlu0
        %v360 = vpop.trf.xlu0
        %v361 = vpop.trf.xlu0
        %v362 = vpop.trf.xlu0
        %v363 = vpop.trf.xlu0
        %v364 = vpop.trf.xlu0
        %365 = vxpose.xlu0.b32.start [1/16] %v175, 128
        %366 = vxpose.xlu0.b32.cont [2/16] %v179, 128
        %367 = vxpose.xlu0.b32.cont [3/16] %v183, 128
        %368 = vxpose.xlu0.b32.cont [4/16] %v187, 128
        %369 = vxpose.xlu0.b32.cont [5/16] %v191, 128
        %370 = vxpose.xlu0.b32.cont [6/16] %v195, 128
        %371 = vxpose.xlu0.b32.cont [7/16] %v199, 128
        %372 = vxpose.xlu0.b32.cont [8/16] %v203, 128
        %373 = vxpose.xlu0.b32.cont [9/16] %v207, 128
        %374 = vxpose.xlu0.b32.cont [10/16] %v211, 128
        %375 = vxpose.xlu0.b32.cont [11/16] %v215, 128
        %376 = vxpose.xlu0.b32.cont [12/16] %v219, 128
        %377 = vxpose.xlu0.b32.cont [13/16] %v223, 128
        %378 = vxpose.xlu0.b32.cont [14/16] %v227, 128
        %379 = vxpose.xlu0.b32.cont [15/16] %v231, 128
        %380 = vxpose.xlu0.b32.end [16/16] %v235, 128
        %v381 = vpop.trf.xlu0
        %v382 = vpop.trf.xlu0
        %v383 = vpop.trf.xlu0
        %v384 = vpop.trf.xlu0
        %v385 = vpop.trf.xlu0
        %v386 = vpop.trf.xlu0
        %v387 = vpop.trf.xlu0
        %v388 = vpop.trf.xlu0
        %v389 = vpop.trf.xlu0
        %v390 = vpop.trf.xlu0
        %v391 = vpop.trf.xlu0
        %v392 = vpop.trf.xlu0
        %v393 = vpop.trf.xlu0
        %v394 = vpop.trf.xlu0
        %v395 = vpop.trf.xlu0
        %v396 = vpop.trf.xlu0
        %397 = vxpose.xlu0.b32.start [1/16] %v176, 128
        %398 = vxpose.xlu0.b32.cont [2/16] %v180, 128
        %399 = vxpose.xlu0.b32.cont [3/16] %v184, 128
        %400 = vxpose.xlu0.b32.cont [4/16] %v188, 128
        %401 = vxpose.xlu0.b32.cont [5/16] %v192, 128
        %402 = vxpose.xlu0.b32.cont [6/16] %v196, 128
        %403 = vxpose.xlu0.b32.cont [7/16] %v200, 128
        %404 = vxpose.xlu0.b32.cont [8/16] %v204, 128
        %405 = vxpose.xlu0.b32.cont [9/16] %v208, 128
        %406 = vxpose.xlu0.b32.cont [10/16] %v212, 128
        %407 = vxpose.xlu0.b32.cont [11/16] %v216, 128
        %408 = vxpose.xlu0.b32.cont [12/16] %v220, 128
        %409 = vxpose.xlu0.b32.cont [13/16] %v224, 128
        %410 = vxpose.xlu0.b32.cont [14/16] %v228, 128
        %411 = vxpose.xlu0.b32.cont [15/16] %v232, 128
        %412 = vxpose.xlu0.b32.end [16/16] %v236, 128
        %v413 = vpop.trf.xlu0
        %v414 = vpop.trf.xlu0
        %v415 = vpop.trf.xlu0
        %v416 = vpop.trf.xlu0
        %v417 = vpop.trf.xlu0
        %v418 = vpop.trf.xlu0
        %v419 = vpop.trf.xlu0
        %v420 = vpop.trf.xlu0
        %v421 = vpop.trf.xlu0
        %v422 = vpop.trf.xlu0
        %v423 = vpop.trf.xlu0
        %v424 = vpop.trf.xlu0
        %v425 = vpop.trf.xlu0
        %v426 = vpop.trf.xlu0
        %v427 = vpop.trf.xlu0
        %v428 = vpop.trf.xlu0
        %429 = vxpose.xlu0.b32.start [1/16] %v237, 128
        %430 = vxpose.xlu0.b32.cont [2/16] %v241, 128
        %431 = vxpose.xlu0.b32.cont [3/16] %v245, 128
        %432 = vxpose.xlu0.b32.cont [4/16] %v249, 128
        %433 = vxpose.xlu0.b32.cont [5/16] %v253, 128
        %434 = vxpose.xlu0.b32.cont [6/16] %v257, 128
        %435 = vxpose.xlu0.b32.cont [7/16] %v261, 128
        %436 = vxpose.xlu0.b32.cont [8/16] %v265, 128
        %437 = vxpose.xlu0.b32.cont [9/16] %v269, 128
        %438 = vxpose.xlu0.b32.cont [10/16] %v273, 128
        %439 = vxpose.xlu0.b32.cont [11/16] %v277, 128
        %440 = vxpose.xlu0.b32.cont [12/16] %v281, 128
        %441 = vxpose.xlu0.b32.cont [13/16] %v285, 128
        %442 = vxpose.xlu0.b32.cont [14/16] %v289, 128
        %443 = vxpose.xlu0.b32.cont [15/16] %v293, 128
        %444 = vxpose.xlu0.b32.end [16/16] %v297, 128
        %v445 = vpop.trf.xlu0
        %v446 = vpop.trf.xlu0
        %v447 = vpop.trf.xlu0
        %v448 = vpop.trf.xlu0
        %v449 = vpop.trf.xlu0
        %v450 = vpop.trf.xlu0
        %v451 = vpop.trf.xlu0
        %v452 = vpop.trf.xlu0
        %v453 = vpop.trf.xlu0
        %v454 = vpop.trf.xlu0
        %v455 = vpop.trf.xlu0
        %v456 = vpop.trf.xlu0
        %v457 = vpop.trf.xlu0
        %v458 = vpop.trf.xlu0
        %v459 = vpop.trf.xlu0
        %v460 = vpop.trf.xlu0
        %461 = vxpose.xlu0.b32.start [1/16] %v238, 128
        %462 = vxpose.xlu0.b32.cont [2/16] %v242, 128
        %463 = vxpose.xlu0.b32.cont [3/16] %v246, 128
        %464 = vxpose.xlu0.b32.cont [4/16] %v250, 128
        %465 = vxpose.xlu0.b32.cont [5/16] %v254, 128
        %466 = vxpose.xlu0.b32.cont [6/16] %v258, 128
        %467 = vxpose.xlu0.b32.cont [7/16] %v262, 128
        %468 = vxpose.xlu0.b32.cont [8/16] %v266, 128
        %469 = vxpose.xlu0.b32.cont [9/16] %v270, 128
        %470 = vxpose.xlu0.b32.cont [10/16] %v274, 128
        %471 = vxpose.xlu0.b32.cont [11/16] %v278, 128
        %472 = vxpose.xlu0.b32.cont [12/16] %v282, 128
        %473 = vxpose.xlu0.b32.cont [13/16] %v286, 128
        %474 = vxpose.xlu0.b32.cont [14/16] %v290, 128
        %475 = vxpose.xlu0.b32.cont [15/16] %v294, 128
        %476 = vxpose.xlu0.b32.end [16/16] %v298, 128
        %v477 = vpop.trf.xlu0
        %v478 = vpop.trf.xlu0
        %v479 = vpop.trf.xlu0
        %v480 = vpop.trf.xlu0
        %v481 = vpop.trf.xlu0
        %v482 = vpop.trf.xlu0
        %v483 = vpop.trf.xlu0
        %v484 = vpop.trf.xlu0
        %v485 = vpop.trf.xlu0
        %v486 = vpop.trf.xlu0
        %v487 = vpop.trf.xlu0
        %v488 = vpop.trf.xlu0
        %v489 = vpop.trf.xlu0
        %v490 = vpop.trf.xlu0
        %v491 = vpop.trf.xlu0
        %v492 = vpop.trf.xlu0
        %493 = vxpose.xlu0.b32.start [1/16] %v239, 128
        %494 = vxpose.xlu0.b32.cont [2/16] %v243, 128
        %495 = vxpose.xlu0.b32.cont [3/16] %v247, 128
        %496 = vxpose.xlu0.b32.cont [4/16] %v251, 128
        %497 = vxpose.xlu0.b32.cont [5/16] %v255, 128
        %498 = vxpose.xlu0.b32.cont [6/16] %v259, 128
        %499 = vxpose.xlu0.b32.cont [7/16] %v263, 128
        %500 = vxpose.xlu0.b32.cont [8/16] %v267, 128
        %501 = vxpose.xlu0.b32.cont [9/16] %v271, 128
        %502 = vxpose.xlu0.b32.cont [10/16] %v275, 128
        %503 = vxpose.xlu0.b32.cont [11/16] %v279, 128
        %504 = vxpose.xlu0.b32.cont [12/16] %v283, 128
        %505 = vxpose.xlu0.b32.cont [13/16] %v287, 128
        %506 = vxpose.xlu0.b32.cont [14/16] %v291, 128
        %507 = vxpose.xlu0.b32.cont [15/16] %v295, 128
        %508 = vxpose.xlu0.b32.end [16/16] %v299, 128
        %v509 = vpop.trf.xlu0
        %v510 = vpop.trf.xlu0
        %v511 = vpop.trf.xlu0
        %v512 = vpop.trf.xlu0
        %v513 = vpop.trf.xlu0
        %v514 = vpop.trf.xlu0
        %v515 = vpop.trf.xlu0
        %v516 = vpop.trf.xlu0
        %v517 = vpop.trf.xlu0
        %v518 = vpop.trf.xlu0
        %v519 = vpop.trf.xlu0
        %v520 = vpop.trf.xlu0
        %v521 = vpop.trf.xlu0
        %v522 = vpop.trf.xlu0
        %v523 = vpop.trf.xlu0
        %v524 = vpop.trf.xlu0
        %525 = vxpose.xlu0.b32.start [1/16] %v240, 128
        %526 = vxpose.xlu0.b32.cont [2/16] %v244, 128
        %527 = vxpose.xlu0.b32.cont [3/16] %v248, 128
        %528 = vxpose.xlu0.b32.cont [4/16] %v252, 128
        %529 = vxpose.xlu0.b32.cont [5/16] %v256, 128
        %530 = vxpose.xlu0.b32.cont [6/16] %v260, 128
        %531 = vxpose.xlu0.b32.cont [7/16] %v264, 128
        %532 = vxpose.xlu0.b32.cont [8/16] %v268, 128
        %533 = vxpose.xlu0.b32.cont [9/16] %v272, 128
        %534 = vxpose.xlu0.b32.cont [10/16] %v276, 128
        %535 = vxpose.xlu0.b32.cont [11/16] %v280, 128
        %536 = vxpose.xlu0.b32.cont [12/16] %v284, 128
        %537 = vxpose.xlu0.b32.cont [13/16] %v288, 128
        %538 = vxpose.xlu0.b32.cont [14/16] %v292, 128
        %539 = vxpose.xlu0.b32.cont [15/16] %v296, 128
        %540 = vxpose.xlu0.b32.end [16/16] %v300, 128
        %v541 = vpop.trf.xlu0
        %v542 = vpop.trf.xlu0
        %v543 = vpop.trf.xlu0
        %v544 = vpop.trf.xlu0
        %v545 = vpop.trf.xlu0
        %v546 = vpop.trf.xlu0
        %v547 = vpop.trf.xlu0
        %v548 = vpop.trf.xlu0
        %v549 = vpop.trf.xlu0
        %v550 = vpop.trf.xlu0
        %v551 = vpop.trf.xlu0
        %v552 = vpop.trf.xlu0
        %v553 = vpop.trf.xlu0
        %v554 = vpop.trf.xlu0
        %v555 = vpop.trf.xlu0
        %v556 = vpop.trf.xlu0
        %557 = vst [vmem:[%s168] sm:$0xff] %v317
        %558 = vst [vmem:[%s168 + $0x8] sm:$0xff] %v445
        %559 = vst [vmem:[%s168 + $0x10] sm:$0xff] %v318
        %560 = vst [vmem:[%s168 + $0x18] sm:$0xff] %v446
        %561 = vst [vmem:[%s168 + $0x20] sm:$0xff] %v319
        %562 = vst [vmem:[%s168 + $0x28] sm:$0xff] %v447
        %563 = vst [vmem:[%s168 + $0x30] sm:$0xff] %v320
        %564 = vst [vmem:[%s168 + $0x38] sm:$0xff] %v448
        %565 = vst [vmem:[%s168 + $0x40] sm:$0xff] %v321
        %566 = vst [vmem:[%s168 + $0x48] sm:$0xff] %v449
        %567 = vst [vmem:[%s168 + $0x50] sm:$0xff] %v322
        %568 = vst [vmem:[%s168 + $0x58] sm:$0xff] %v450
        %569 = vst [vmem:[%s168 + $0x60] sm:$0xff] %v323
        %570 = vst [vmem:[%s168 + $0x68] sm:$0xff] %v451
        %571 = vst [vmem:[%s168 + $0x70] sm:$0xff] %v324
        %572 = vst [vmem:[%s168 + $0x78] sm:$0xff] %v452
        %573 = vst [vmem:[%s168 + $0x80] sm:$0xff] %v325
        %574 = vst [vmem:[%s168 + $0x88] sm:$0xff] %v453
        %575 = vst [vmem:[%s168 + $0x90] sm:$0xff] %v326
        %576 = vst [vmem:[%s168 + $0x98] sm:$0xff] %v454
        %577 = vst [vmem:[%s168 + $0xa0] sm:$0xff] %v327
        %578 = vst [vmem:[%s168 + $0xa8] sm:$0xff] %v455
        %579 = vst [vmem:[%s168 + $0xb0] sm:$0xff] %v328
        %580 = vst [vmem:[%s168 + $0xb8] sm:$0xff] %v456
        %581 = vst [vmem:[%s168 + $0xc0] sm:$0xff] %v329
        %582 = vst [vmem:[%s168 + $0xc8] sm:$0xff] %v457
        %583 = vst [vmem:[%s168 + $0xd0] sm:$0xff] %v330
        %584 = vst [vmem:[%s168 + $0xd8] sm:$0xff] %v458
        %585 = vst [vmem:[%s168 + $0xe0] sm:$0xff] %v331
        %586 = vst [vmem:[%s168 + $0xe8] sm:$0xff] %v459
        %587 = vst [vmem:[%s168 + $0xf0] sm:$0xff] %v332
        %588 = vst [vmem:[%s168 + $0xf8] sm:$0xff] %v460
        %589 = vst [vmem:[%s168 + $0x100] sm:$0xff] %v349
        %590 = vst [vmem:[%s168 + $0x108] sm:$0xff] %v477
        %591 = vst [vmem:[%s168 + $0x110] sm:$0xff] %v350
        %592 = vst [vmem:[%s168 + $0x118] sm:$0xff] %v478
        %593 = vst [vmem:[%s168 + $0x120] sm:$0xff] %v351
        %594 = vst [vmem:[%s168 + $0x128] sm:$0xff] %v479
        %595 = vst [vmem:[%s168 + $0x130] sm:$0xff] %v352
        %596 = vst [vmem:[%s168 + $0x138] sm:$0xff] %v480
        %597 = vst [vmem:[%s168 + $0x140] sm:$0xff] %v353
        %598 = vst [vmem:[%s168 + $0x148] sm:$0xff] %v481
        %599 = vst [vmem:[%s168 + $0x150] sm:$0xff] %v354
        %600 = vst [vmem:[%s168 + $0x158] sm:$0xff] %v482
        %601 = vst [vmem:[%s168 + $0x160] sm:$0xff] %v355
        %602 = vst [vmem:[%s168 + $0x168] sm:$0xff] %v483
        %603 = vst [vmem:[%s168 + $0x170] sm:$0xff] %v356
        %604 = vst [vmem:[%s168 + $0x178] sm:$0xff] %v484
        %605 = vst [vmem:[%s168 + $0x180] sm:$0xff] %v357
        %606 = vst [vmem:[%s168 + $0x188] sm:$0xff] %v485
        %607 = vst [vmem:[%s168 + $0x190] sm:$0xff] %v358
        %608 = vst [vmem:[%s168 + $0x198] sm:$0xff] %v486
        %609 = vst [vmem:[%s168 + $0x1a0] sm:$0xff] %v359
        %610 = vst [vmem:[%s168 + $0x1a8] sm:$0xff] %v487
        %611 = vst [vmem:[%s168 + $0x1b0] sm:$0xff] %v360
        %612 = vst [vmem:[%s168 + $0x1b8] sm:$0xff] %v488
        %613 = vst [vmem:[%s168 + $0x1c0] sm:$0xff] %v361
        %614 = vst [vmem:[%s168 + $0x1c8] sm:$0xff] %v489
        %615 = vst [vmem:[%s168 + $0x1d0] sm:$0xff] %v362
        %616 = vst [vmem:[%s168 + $0x1d8] sm:$0xff] %v490
        %617 = vst [vmem:[%s168 + $0x1e0] sm:$0xff] %v363
        %618 = vst [vmem:[%s168 + $0x1e8] sm:$0xff] %v491
        %619 = vst [vmem:[%s168 + $0x1f0] sm:$0xff] %v364
        %620 = vst [vmem:[%s168 + $0x1f8] sm:$0xff] %v492
        %621 = vst [vmem:[%s168 + $0x200] sm:$0xff] %v381
        %622 = vst [vmem:[%s168 + $0x208] sm:$0xff] %v509
        %623 = vst [vmem:[%s168 + $0x210] sm:$0xff] %v382
        %624 = vst [vmem:[%s168 + $0x218] sm:$0xff] %v510
        %625 = vst [vmem:[%s168 + $0x220] sm:$0xff] %v383
        %626 = vst [vmem:[%s168 + $0x228] sm:$0xff] %v511
        %627 = vst [vmem:[%s168 + $0x230] sm:$0xff] %v384
        %628 = vst [vmem:[%s168 + $0x238] sm:$0xff] %v512
        %629 = vst [vmem:[%s168 + $0x240] sm:$0xff] %v385
        %630 = vst [vmem:[%s168 + $0x248] sm:$0xff] %v513
        %631 = vst [vmem:[%s168 + $0x250] sm:$0xff] %v386
        %632 = vst [vmem:[%s168 + $0x258] sm:$0xff] %v514
        %633 = vst [vmem:[%s168 + $0x260] sm:$0xff] %v387
        %634 = vst [vmem:[%s168 + $0x268] sm:$0xff] %v515
        %635 = vst [vmem:[%s168 + $0x270] sm:$0xff] %v388
        %636 = vst [vmem:[%s168 + $0x278] sm:$0xff] %v516
        %637 = vst [vmem:[%s168 + $0x280] sm:$0xff] %v389
        %638 = vst [vmem:[%s168 + $0x288] sm:$0xff] %v517
        %639 = vst [vmem:[%s168 + $0x290] sm:$0xff] %v390
        %640 = vst [vmem:[%s168 + $0x298] sm:$0xff] %v518
        %641 = vst [vmem:[%s168 + $0x2a0] sm:$0xff] %v391
        %642 = vst [vmem:[%s168 + $0x2a8] sm:$0xff] %v519
        %643 = vst [vmem:[%s168 + $0x2b0] sm:$0xff] %v392
        %644 = vst [vmem:[%s168 + $0x2b8] sm:$0xff] %v520
        %645 = vst [vmem:[%s168 + $0x2c0] sm:$0xff] %v393
        %646 = vst [vmem:[%s168 + $0x2c8] sm:$0xff] %v521
        %647 = vst [vmem:[%s168 + $0x2d0] sm:$0xff] %v394
        %648 = vst [vmem:[%s168 + $0x2d8] sm:$0xff] %v522
        %649 = vst [vmem:[%s168 + $0x2e0] sm:$0xff] %v395
        %650 = vst [vmem:[%s168 + $0x2e8] sm:$0xff] %v523
        %651 = vst [vmem:[%s168 + $0x2f0] sm:$0xff] %v396
        %652 = vst [vmem:[%s168 + $0x2f8] sm:$0xff] %v524
        %653 = vst [vmem:[%s168 + $0x300] sm:$0xff] %v413
        %654 = vst [vmem:[%s168 + $0x308] sm:$0xff] %v541
        %655 = vst [vmem:[%s168 + $0x310] sm:$0xff] %v414
        %656 = vst [vmem:[%s168 + $0x318] sm:$0xff] %v542
        %657 = vst [vmem:[%s168 + $0x320] sm:$0xff] %v415
        %658 = vst [vmem:[%s168 + $0x328] sm:$0xff] %v543
        %659 = vst [vmem:[%s168 + $0x330] sm:$0xff] %v416
        %660 = vst [vmem:[%s168 + $0x338] sm:$0xff] %v544
        %661 = vst [vmem:[%s168 + $0x340] sm:$0xff] %v417
        %662 = vst [vmem:[%s168 + $0x348] sm:$0xff] %v545
        %663 = vst [vmem:[%s168 + $0x350] sm:$0xff] %v418
        %664 = vst [vmem:[%s168 + $0x358] sm:$0xff] %v546
        %665 = vst [vmem:[%s168 + $0x360] sm:$0xff] %v419
        %666 = vst [vmem:[%s168 + $0x368] sm:$0xff] %v547
        %667 = vst [vmem:[%s168 + $0x370] sm:$0xff] %v420
        %668 = vst [vmem:[%s168 + $0x378] sm:$0xff] %v548
        %669 = vst [vmem:[%s168 + $0x380] sm:$0xff] %v421
        %670 = vst [vmem:[%s168 + $0x388] sm:$0xff] %v549
        %671 = vst [vmem:[%s168 + $0x390] sm:$0xff] %v422
        %672 = vst [vmem:[%s168 + $0x398] sm:$0xff] %v550
        %673 = vst [vmem:[%s168 + $0x3a0] sm:$0xff] %v423
        %674 = vst [vmem:[%s168 + $0x3a8] sm:$0xff] %v551
        %675 = vst [vmem:[%s168 + $0x3b0] sm:$0xff] %v424
        %676 = vst [vmem:[%s168 + $0x3b8] sm:$0xff] %v552
        %677 = vst [vmem:[%s168 + $0x3c0] sm:$0xff] %v425
        %678 = vst [vmem:[%s168 + $0x3c8] sm:$0xff] %v553
        %679 = vst [vmem:[%s168 + $0x3d0] sm:$0xff] %v426
        %680 = vst [vmem:[%s168 + $0x3d8] sm:$0xff] %v554
        %681 = vst [vmem:[%s168 + $0x3e0] sm:$0xff] %v427
        %682 = vst [vmem:[%s168 + $0x3e8] sm:$0xff] %v555
        %683 = vst [vmem:[%s168 + $0x3f0] sm:$0xff] %v428
        %684 = vst [vmem:[%s168 + $0x3f8] sm:$0xff] %v556
        %s685 = sand.u32 %s79, 1
        %s686 = scalar_lea.sflag [#allocation4], %s685
        %s687 = sand.u32 %s79, 1
        %s688 = smul.addr %s687, 1024
        %s689 = scalar_lea.vmem [#allocation5], %s688
        // Predicated region
        $region29: #{tpu_custom_call.1} parent=23 // pred_check
          %p690 = pneg %p89
        $region30: #{tpu_custom_call.1} parent=23 // pred_check_branch
          %692 = sbr.rel (%p690) target = $region32
        $region31: #{tpu_custom_call.1} parent=23 // pred_region
          %s693 = smul.u32 64, %s24
          %s694 = smul.u32 2, %s25
          %696 = vsyncadd %s686, 0
          %s697 = smul.addr %s693, 2
          %s698 = sadd.s32 %s694, %s697
          %s699 = smul.addr %s23, 256
          %s700 = sadd.s32 %s698, %s699
          %s701 = smul.addr %s700, 8
          %s702 = scalar_lea.hbm %s1, %s701
          %s703 = sshll.u32 %s689, 4
          %s704 = int_to_ptr.vmem [resolvable:$true] %s703
          %s705 = sshll.u32 %s702, 4
          %s706 = int_to_ptr.hbm [resolvable:$true] %s705
          %711 = dma.vmem_to_hbm [thread:$0]  %s704, 16384, %s706, %s686, 256, 256, 16
        $region32: #{tpu_custom_call.1} parent=23 // pred_fallthru
          _
      $region24: #{tpu_custom_call.1} parent=5 // pred_fallthru
        _
      %p712 = scmp.le.s32.totalorder 2, %s13
      // Predicated region
      $region33: #{tpu_custom_call.1} parent=5 // pred_check
        %p713 = pneg %p712
      $region34: #{tpu_custom_call.1} parent=5 // pred_check_branch
        %715 = sbr.rel (%p713) target = $region36
      $region35: #{tpu_custom_call.1} parent=5 // pred_region
        %s716 = ssub.s32 %s13, 2
        // Predicated region
        $region37: #{tpu_custom_call.1} parent=35 // pred_check
          %p717 = pneg %p95
        $region38: #{tpu_custom_call.1} parent=35 // pred_check_branch
          %719 = sbr.rel (%p717) target = $region40
        $region39: #{tpu_custom_call.1} parent=35 // pred_region
          %s720 = sand.u32 %s80, 1
          %s721 = scalar_lea.sflag [#allocation4], %s720
          %s722 = sand.u32 %s80, 1
          %s723 = smul.addr %s722, 1024
          %s724 = scalar_lea.vmem [#allocation5], %s723
          %726 = dma.done %s721, 16384
        $region40: #{tpu_custom_call.1} parent=35 // pred_fallthru
          _
      $region36: #{tpu_custom_call.1} parent=5 // pred_fallthru
        _
    $region6: #{tpu_custom_call.1} parent=1 // loop_footer
      %s17 = sadd.s32 1, %s13
    $region7: #{tpu_custom_call.1} parent=1 // loop_footer_branch
      %12 = sbr.rel target = $region3
    $region8: #{tpu_custom_call.1} parent=1 // loop_exit
      _
    %727 = vsyncpa [#allocation3], 1
    %s728 = scalar_lea.sflag [#allocation3], 1
    %729 = vsyncpa %s728, 1
    %730 = vsyncpa [#allocation4], 1
    %s731 = scalar_lea.sflag [#allocation4], 1
    %732 = vsyncpa %s731, 1

</llo_original>
